<compile_context>
chip_gen: v5e
topology: v5e:2x2
jax: 0.10.0
libtpu: 0.0.40
codegen_flags: <defaults>
</compile_context>

<pallas_src>
import jax
import jax.numpy as jnp
import numpy as np
from jax.experimental import pallas as pl
from jax.experimental.pallas import tpu as pltpu


def _round_up(n, m):
    return (n + m - 1) // m * m


# ----------------------------------------------------------------------------
# Kernel factory (shapes / downsample flag are static).
# ----------------------------------------------------------------------------
def _make_resblock_kernel(B, H, W, Cpad, has_down):
    BP = B * H * W
    taps = [(dy, dx) for dy in (-1, 0, 1) for dx in (-1, 0, 1)]

    def kernel(*refs):
        if has_down:
            (x_ref, m_ref, w1_ref, b1_ref, w2_ref, b2_ref, wd_ref, bd_ref,
             o_ref, s_ref, skip_ref) = refs
        else:
            (x_ref, m_ref, w1_ref, b1_ref, w2_ref, b2_ref,
             o_ref, s_ref, skip_ref) = refs

        def build_stack(act):
            # act: (Cpad, BP) f32 value -> bf16 im2col tap stack in s_ref.
            # tap[q] = act[q + s] with s = dy*W + dx; wrap-around / cross-image
            # / out-of-range columns are zeroed by the precomputed masks.
            for t, (dy, dx) in enumerate(taps):
                s = dy * W + dx
                if s == 0:
                    tap = act                              # center tap: always valid
                else:
                    tap = pltpu.roll(act, shift=(-s) % BP, axis=1)
                    tap = tap * m_ref[t]                   # pre-replicated 0/1 mask
                s_ref[t * Cpad:(t + 1) * Cpad, :] = tap.astype(s_ref.dtype)

        def stack_matmul(w_ref, b_ref):
            # (Cpad, 9*Cpad) bf16 @ (9*Cpad, BP) bf16 -> f32, + bias (Cpad, 1)
            return jnp.dot(w_ref[...], s_ref[...],
                           preferred_element_type=jnp.float32) + b_ref[...]

        x = x_ref[...]                                     # (Cpad, BP) f32
        if has_down:
            build_stack(x)                                 # shared stack of raw x
            skip_ref[...] = stack_matmul(wd_ref, bd_ref)   # downsample(x)
            s_ref[...] = jnp.maximum(s_ref[...], 0.0)      # relu stack in place
            r = stack_matmul(w1_ref, b1_ref)               # conv1(relu(x))
        else:
            skip_ref[...] = x                              # identity skip
            build_stack(jnp.maximum(x, 0.0))
            r = stack_matmul(w1_ref, b1_ref)               # conv1(relu(x))

        build_stack(jnp.maximum(r, 0.0))
        r = stack_matmul(w2_ref, b2_ref)                   # conv2(relu(r))
        o_ref[...] = skip_ref[...] + r                     # full-width aligned store

    return kernel


# ----------------------------------------------------------------------------
# Host-side helpers + pallas_call wrapper.
# ----------------------------------------------------------------------------
def _tap_masks(B, H, W, Cpad):
    """(9, Cpad, B*H*W) f32 0/1 validity masks for the 9 taps (padding=1)."""
    P = H * W
    q = jnp.arange(B * P, dtype=jnp.int32)
    p = q % P
    y = p // W
    x = p % W
    rows = []
    for dy in (-1, 0, 1):
        for dx in (-1, 0, 1):
            ok = (y + dy >= 0) & (y + dy < H) & (x + dx >= 0) & (x + dx < W)
            rows.append(ok)
    m = jnp.stack(rows).astype(jnp.float32)                    # (9, BP)
    return jnp.broadcast_to(m[:, None, :], (9, Cpad, B * P))   # pre-replicated


def _flatten_w(w, cpad_out, cpad_in):
    # (Cout, Cin, 3, 3) -> (Cpad_out, 9*Cpad_in) bf16, row order (ky, kx, cin)
    # with zero padding in both M (out channels) and per-tap K (in channels),
    # matching the 8-aligned tap-stack row stride built inside the kernel.
    cout, cin = w.shape[0], w.shape[1]
    wt = jnp.transpose(w.astype(jnp.float32), (0, 2, 3, 1))    # (Cout, 3, 3, Cin)
    wt = jnp.pad(wt, ((0, cpad_out - cout), (0, 0), (0, 0), (0, cpad_in - cin)))
    return wt.reshape(cpad_out, 9 * cpad_in).astype(jnp.bfloat16)


def _pad_bias(b, cpad):
    return jnp.pad(b.astype(jnp.float32), (0, cpad - b.shape[0])).reshape(cpad, 1)


@jax.jit
def resblock_pallas(x, w1, b1, w2, b2, wd=None, bd=None):
    B, Cin, H, W = x.shape
    Cout = w1.shape[0]
    has_down = wd is not None
    BP = B * H * W
    Cpad = _round_up(max(Cin, Cout), 8)

    # Lane-dense layout: rows = (zero-padded) channels, lanes = (b, y, x) flat.
    x_flat = jnp.transpose(x.astype(jnp.float32), (1, 0, 2, 3)).reshape(Cin, BP)
    x_flat = jnp.pad(x_flat, ((0, Cpad - Cin), (0, 0)))

    args = [x_flat, _tap_masks(B, H, W, Cpad),
            _flatten_w(w1, Cpad, Cpad), _pad_bias(b1, Cpad),
            _flatten_w(w2, Cpad, Cpad), _pad_bias(b2, Cpad)]
    if has_down:
        args += [_flatten_w(wd, Cpad, Cpad), _pad_bias(bd, Cpad)]

    vmem = pl.BlockSpec(memory_space=pltpu.MemorySpace.VMEM)
    out = pl.pallas_call(
        _make_resblock_kernel(B, H, W, Cpad, has_down),
        out_shape=jax.ShapeDtypeStruct((Cpad, BP), jnp.float32),
        in_specs=[vmem] * len(args),
        out_specs=vmem,
        scratch_shapes=[
            pltpu.VMEM((9 * Cpad, BP), jnp.bfloat16),   # shared bf16 im2col stack
            pltpu.VMEM((Cpad, BP), jnp.float32),        # staged skip path
        ],
    )(*args)
    return jnp.transpose(out[:Cout].reshape(Cout, B, H, W), (1, 0, 2, 3))


# ----------------------------------------------------------------------------
# Pure-JAX reference (mirrors the PyTorch forward exactly).
# ----------------------------------------------------------------------------
def _conv3x3_ref(x, w, b):
    y = jax.lax.conv_general_dilated(
        x, w, window_strides=(1, 1), padding=((1, 1), (1, 1)),
        dimension_numbers=("NCHW", "OIHW", "NCHW"))
    return y + b[None, :, None, None]


def resblock_ref(x, w1, b1, w2, b2, wd=None, bd=None):
    x = x.astype(jnp.float32)
    r = _conv3x3_ref(jax.nn.relu(x), w1, b1)
    r = _conv3x3_ref(jax.nn.relu(r), w2, b2)
    skip = x if wd is None else _conv3x3_ref(x, wd, bd)
    return skip + r


# ----------------------------------------------------------------------------
if __name__ == "__main__":
    key = jax.random.PRNGKey(0)
    B, H, W = 2, 16, 16

    def init_conv(k, cin, cout):
        k1, k2 = jax.random.split(k)
        bound = 1.0 / (cin * 9) ** 0.5            # PyTorch-style uniform init
        w = jax.random.uniform(k1, (cout, cin, 3, 3), jnp.float32, -bound, bound)
        b = jax.random.uniform(k2, (cout,), jnp.float32, -bound, bound)
        return w, b

    kx, ka, kb, kc, kd = jax.random.split(key, 5)

    # --- Case 1: indim == outdim (downsample is None) -------------------------
    Cin = Cout = 4
    x = jax.random.normal(kx, (B, Cin, H, W), dtype=jnp.float32)
    w1, b1 = init_conv(ka, Cin, Cout)
    w2, b2 = init_conv(kb, Cout, Cout)
    out = jax.block_until_ready(resblock_pallas(x, w1, b1, w2, b2))
    ref = jax.block_until_ready(resblock_ref(x, w1, b1, w2, b2))
    # bf16 MXU operands / f32 accumulation -> bf16-level tolerance (documented).
    np.testing.assert_allclose(np.asarray(out), np.asarray(ref), rtol=2e-2, atol=2e-2)

    # --- Case 2: indim != outdim (3x3 downsample conv on the skip path) -------
    Cin2, Cout2 = 4, 8
    x2 = jax.random.normal(kc, (B, Cin2, H, W), dtype=jnp.float32)
    w1b, b1b = init_conv(ka, Cin2, Cout2)
    w2b, b2b = init_conv(kb, Cout2, Cout2)
    wd, bd = init_conv(kd, Cin2, Cout2)
    out2 = jax.block_until_ready(resblock_pallas(x2, w1b, b1b, w2b, b2b, wd, bd))
    ref2 = jax.block_until_ready(resblock_ref(x2, w1b, b1b, w2b, b2b, wd, bd))
    np.testing.assert_allclose(np.asarray(out2), np.asarray(ref2), rtol=2e-2, atol=2e-2)

    print("KERNEL_OK")
</pallas_src>

<mosaic_0001>
module attributes {stable_mosaic.version = 11 : i64} {
  func.func @kernel(%arg0: memref<8x512xf32, #tpu.memory_space<vmem>>, %arg1: memref<9x8x512xf32, #tpu.memory_space<vmem>>, %arg2: memref<8x72xbf16, #tpu.memory_space<vmem>>, %arg3: memref<8x1xf32, #tpu.memory_space<vmem>>, %arg4: memref<8x72xbf16, #tpu.memory_space<vmem>>, %arg5: memref<8x1xf32, #tpu.memory_space<vmem>>, %arg6: memref<8x512xf32, #tpu.memory_space<vmem>>, %arg7: memref<72x512xbf16, #tpu.memory_space<vmem>>, %arg8: memref<8x512xf32, #tpu.memory_space<vmem>>) attributes {dimension_semantics = [], scalar_prefetch = 0 : i64, scratch_operands = 2 : i64, tpu.core_type = #tpu.core_type<tc>} {
    %c0 = arith.constant 0 : index
    %c0_0 = arith.constant 0 : index
    %0 = vector.load %arg0[%c0, %c0_0] : memref<8x512xf32, #tpu.memory_space<vmem>>, vector<8x512xf32>
    %c0_1 = arith.constant 0 : index
    %c0_2 = arith.constant 0 : index
    %1 = vector.load %arg8[%c0_1, %c0_2] : memref<8x512xf32, #tpu.memory_space<vmem>>, vector<8x512xf32>
    tpu.vector_store %arg8[%c0_1, %c0_2], %0 {strides = array<i32>} : memref<8x512xf32, #tpu.memory_space<vmem>>, vector<8x512xf32>,
    %cst = arith.constant 0.000000e+00 : f32
    %2 = vector.broadcast %cst : f32 to vector<8x512xf32>
    %3 = arith.maximumf %0, %2 : vector<8x512xf32>
    %c17_i32 = arith.constant 17 : i32
    %4 = tpu.dynamic_rotate %3 by %c17_i32 dim 1 : vector<8x512xf32>, i32 -> vector<8x512xf32>
    %c0_3 = arith.constant 0 : index
    %c0_4 = arith.constant 0 : index
    %c0_5 = arith.constant 0 : index
    %5 = vector.load %arg1[%c0_3, %c0_4, %c0_5] : memref<9x8x512xf32, #tpu.memory_space<vmem>>, vector<1x8x512xf32>
    %6 = vector.shape_cast %5 : vector<1x8x512xf32> to vector<8x512xf32>
    %7 = arith.mulf %4, %6 : vector<8x512xf32>
    %8 = arith.truncf %7 : vector<8x512xf32> to vector<8x512xbf16>
    %c0_6 = arith.constant 0 : index
    %c0_7 = arith.constant 0 : index
    %9 = vector.load %arg7[%c0_6, %c0_7] : memref<72x512xbf16, #tpu.memory_space<vmem>>, vector<8x512xbf16>
    tpu.vector_store %arg7[%c0_6, %c0_7], %8 {strides = array<i32>} : memref<72x512xbf16, #tpu.memory_space<vmem>>, vector<8x512xbf16>,
    %c16_i32 = arith.constant 16 : i32
    %10 = tpu.dynamic_rotate %3 by %c16_i32 dim 1 : vector<8x512xf32>, i32 -> vector<8x512xf32>
    %c1 = arith.constant 1 : index
    %c0_8 = arith.constant 0 : index
    %c0_9 = arith.constant 0 : index
    %11 = vector.load %arg1[%c1, %c0_8, %c0_9] : memref<9x8x512xf32, #tpu.memory_space<vmem>>, vector<1x8x512xf32>
    %12 = vector.shape_cast %11 : vector<1x8x512xf32> to vector<8x512xf32>
    %13 = arith.mulf %10, %12 : vector<8x512xf32>
    %14 = arith.truncf %13 : vector<8x512xf32> to vector<8x512xbf16>
    %c8 = arith.constant 8 : index
    %c0_10 = arith.constant 0 : index
    %15 = vector.load %arg7[%c8, %c0_10] : memref<72x512xbf16, #tpu.memory_space<vmem>>, vector<8x512xbf16>
    tpu.vector_store %arg7[%c8, %c0_10], %14 {strides = array<i32>} : memref<72x512xbf16, #tpu.memory_space<vmem>>, vector<8x512xbf16>,
    %c15_i32 = arith.constant 15 : i32
    %16 = tpu.dynamic_rotate %3 by %c15_i32 dim 1 : vector<8x512xf32>, i32 -> vector<8x512xf32>
    %c2 = arith.constant 2 : index
    %c0_11 = arith.constant 0 : index
    %c0_12 = arith.constant 0 : index
    %17 = vector.load %arg1[%c2, %c0_11, %c0_12] : memref<9x8x512xf32, #tpu.memory_space<vmem>>, vector<1x8x512xf32>
    %18 = vector.shape_cast %17 : vector<1x8x512xf32> to vector<8x512xf32>
    %19 = arith.mulf %16, %18 : vector<8x512xf32>
    %20 = arith.truncf %19 : vector<8x512xf32> to vector<8x512xbf16>
    %c16 = arith.constant 16 : index
    %c0_13 = arith.constant 0 : index
    %21 = vector.load %arg7[%c16, %c0_13] : memref<72x512xbf16, #tpu.memory_space<vmem>>, vector<8x512xbf16>
    tpu.vector_store %arg7[%c16, %c0_13], %20 {strides = array<i32>} : memref<72x512xbf16, #tpu.memory_space<vmem>>, vector<8x512xbf16>,
    %c1_i32 = arith.constant 1 : i32
    %22 = tpu.dynamic_rotate %3 by %c1_i32 dim 1 : vector<8x512xf32>, i32 -> vector<8x512xf32>
    %c3 = arith.constant 3 : index
    %c0_14 = arith.constant 0 : index
    %c0_15 = arith.constant 0 : index
    %23 = vector.load %arg1[%c3, %c0_14, %c0_15] : memref<9x8x512xf32, #tpu.memory_space<vmem>>, vector<1x8x512xf32>
    %24 = vector.shape_cast %23 : vector<1x8x512xf32> to vector<8x512xf32>
    %25 = arith.mulf %22, %24 : vector<8x512xf32>
    %26 = arith.truncf %25 : vector<8x512xf32> to vector<8x512xbf16>
    %c24 = arith.constant 24 : index
    %c0_16 = arith.constant 0 : index
    %27 = vector.load %arg7[%c24, %c0_16] : memref<72x512xbf16, #tpu.memory_space<vmem>>, vector<8x512xbf16>
    tpu.vector_store %arg7[%c24, %c0_16], %26 {strides = array<i32>} : memref<72x512xbf16, #tpu.memory_space<vmem>>, vector<8x512xbf16>,
    %28 = arith.truncf %3 : vector<8x512xf32> to vector<8x512xbf16>
    %c32 = arith.constant 32 : index
    %c0_17 = arith.constant 0 : index
    %29 = vector.load %arg7[%c32, %c0_17] : memref<72x512xbf16, #tpu.memory_space<vmem>>, vector<8x512xbf16>
    tpu.vector_store %arg7[%c32, %c0_17], %28 {strides = array<i32>} : memref<72x512xbf16, #tpu.memory_space<vmem>>, vector<8x512xbf16>,
    %c511_i32 = arith.constant 511 : i32
    %30 = tpu.dynamic_rotate %3 by %c511_i32 dim 1 : vector<8x512xf32>, i32 -> vector<8x512xf32>
    %c5 = arith.constant 5 : index
    %c0_18 = arith.constant 0 : index
    %c0_19 = arith.constant 0 : index
    %31 = vector.load %arg1[%c5, %c0_18, %c0_19] : memref<9x8x512xf32, #tpu.memory_space<vmem>>, vector<1x8x512xf32>
    %32 = vector.shape_cast %31 : vector<1x8x512xf32> to vector<8x512xf32>
    %33 = arith.mulf %30, %32 : vector<8x512xf32>
    %34 = arith.truncf %33 : vector<8x512xf32> to vector<8x512xbf16>
    %c40 = arith.constant 40 : index
    %c0_20 = arith.constant 0 : index
    %35 = vector.load %arg7[%c40, %c0_20] : memref<72x512xbf16, #tpu.memory_space<vmem>>, vector<8x512xbf16>
    tpu.vector_store %arg7[%c40, %c0_20], %34 {strides = array<i32>} : memref<72x512xbf16, #tpu.memory_space<vmem>>, vector<8x512xbf16>,
    %c497_i32 = arith.constant 497 : i32
    %36 = tpu.dynamic_rotate %3 by %c497_i32 dim 1 : vector<8x512xf32>, i32 -> vector<8x512xf32>
    %c6 = arith.constant 6 : index
    %c0_21 = arith.constant 0 : index
    %c0_22 = arith.constant 0 : index
    %37 = vector.load %arg1[%c6, %c0_21, %c0_22] : memref<9x8x512xf32, #tpu.memory_space<vmem>>, vector<1x8x512xf32>
    %38 = vector.shape_cast %37 : vector<1x8x512xf32> to vector<8x512xf32>
    %39 = arith.mulf %36, %38 : vector<8x512xf32>
    %40 = arith.truncf %39 : vector<8x512xf32> to vector<8x512xbf16>
    %c48 = arith.constant 48 : index
    %c0_23 = arith.constant 0 : index
    %41 = vector.load %arg7[%c48, %c0_23] : memref<72x512xbf16, #tpu.memory_space<vmem>>, vector<8x512xbf16>
    tpu.vector_store %arg7[%c48, %c0_23], %40 {strides = array<i32>} : memref<72x512xbf16, #tpu.memory_space<vmem>>, vector<8x512xbf16>,
    %c496_i32 = arith.constant 496 : i32
    %42 = tpu.dynamic_rotate %3 by %c496_i32 dim 1 : vector<8x512xf32>, i32 -> vector<8x512xf32>
    %c7 = arith.constant 7 : index
    %c0_24 = arith.constant 0 : index
    %c0_25 = arith.constant 0 : index
    %43 = vector.load %arg1[%c7, %c0_24, %c0_25] : memref<9x8x512xf32, #tpu.memory_space<vmem>>, vector<1x8x512xf32>
    %44 = vector.shape_cast %43 : vector<1x8x512xf32> to vector<8x512xf32>
    %45 = arith.mulf %42, %44 : vector<8x512xf32>
    %46 = arith.truncf %45 : vector<8x512xf32> to vector<8x512xbf16>
    %c56 = arith.constant 56 : index
    %c0_26 = arith.constant 0 : index
    %47 = vector.load %arg7[%c56, %c0_26] : memref<72x512xbf16, #tpu.memory_space<vmem>>, vector<8x512xbf16>
    tpu.vector_store %arg7[%c56, %c0_26], %46 {strides = array<i32>} : memref<72x512xbf16, #tpu.memory_space<vmem>>, vector<8x512xbf16>,
    %c495_i32 = arith.constant 495 : i32
    %48 = tpu.dynamic_rotate %3 by %c495_i32 dim 1 : vector<8x512xf32>, i32 -> vector<8x512xf32>
    %c8_27 = arith.constant 8 : index
    %c0_28 = arith.constant 0 : index
    %c0_29 = arith.constant 0 : index
    %49 = vector.load %arg1[%c8_27, %c0_28, %c0_29] : memref<9x8x512xf32, #tpu.memory_space<vmem>>, vector<1x8x512xf32>
    %50 = vector.shape_cast %49 : vector<1x8x512xf32> to vector<8x512xf32>
    %51 = arith.mulf %48, %50 : vector<8x512xf32>
    %52 = arith.truncf %51 : vector<8x512xf32> to vector<8x512xbf16>
    %c64 = arith.constant 64 : index
    %c0_30 = arith.constant 0 : index
    %53 = vector.load %arg7[%c64, %c0_30] : memref<72x512xbf16, #tpu.memory_space<vmem>>, vector<8x512xbf16>
    tpu.vector_store %arg7[%c64, %c0_30], %52 {strides = array<i32>} : memref<72x512xbf16, #tpu.memory_space<vmem>>, vector<8x512xbf16>,
    %c0_31 = arith.constant 0 : index
    %c0_32 = arith.constant 0 : index
    %54 = vector.load %arg2[%c0_31, %c0_32] : memref<8x72xbf16, #tpu.memory_space<vmem>>, vector<8x72xbf16>
    %c0_33 = arith.constant 0 : index
    %c0_34 = arith.constant 0 : index
    %55 = vector.load %arg7[%c0_33, %c0_34] : memref<72x512xbf16, #tpu.memory_space<vmem>>, vector<72x512xbf16>
    %cst_35 = arith.constant dense<0.000000e+00> : vector<8x512xf32>
    %56 = tpu.matmul %54, %55, %cst_35 {dimension_numbers = #tpu.dot_dimension_numbers<[1], [0], [0], [1], [0, 0, 1, 1], [], []>} : vector<8x72xbf16>, vector<72x512xbf16>, vector<8x512xf32> -> vector<8x512xf32>
    %c0_36 = arith.constant 0 : index
    %c0_37 = arith.constant 0 : index
    %57 = vector.load %arg3[%c0_36, %c0_37] : memref<8x1xf32, #tpu.memory_space<vmem>>, vector<8x1xf32>
    %58 = vector.broadcast %57 : vector<8x1xf32> to vector<8x512xf32>
    %59 = arith.addf %56, %58 : vector<8x512xf32>
    %cst_38 = arith.constant 0.000000e+00 : f32
    %60 = vector.broadcast %cst_38 : f32 to vector<8x512xf32>
    %61 = arith.maximumf %59, %60 : vector<8x512xf32>
    %c17_i32_39 = arith.constant 17 : i32
    %62 = tpu.dynamic_rotate %61 by %c17_i32_39 dim 1 : vector<8x512xf32>, i32 -> vector<8x512xf32>
    %c0_40 = arith.constant 0 : index
    %c0_41 = arith.constant 0 : index
    %c0_42 = arith.constant 0 : index
    %63 = vector.load %arg1[%c0_40, %c0_41, %c0_42] : memref<9x8x512xf32, #tpu.memory_space<vmem>>, vector<1x8x512xf32>
    %64 = vector.shape_cast %63 : vector<1x8x512xf32> to vector<8x512xf32>
    %65 = arith.mulf %62, %64 : vector<8x512xf32>
    %66 = arith.truncf %65 : vector<8x512xf32> to vector<8x512xbf16>
    %c0_43 = arith.constant 0 : index
    %c0_44 = arith.constant 0 : index
    %67 = vector.load %arg7[%c0_43, %c0_44] : memref<72x512xbf16, #tpu.memory_space<vmem>>, vector<8x512xbf16>
    tpu.vector_store %arg7[%c0_43, %c0_44], %66 {strides = array<i32>} : memref<72x512xbf16, #tpu.memory_space<vmem>>, vector<8x512xbf16>,
    %c16_i32_45 = arith.constant 16 : i32
    %68 = tpu.dynamic_rotate %61 by %c16_i32_45 dim 1 : vector<8x512xf32>, i32 -> vector<8x512xf32>
    %c1_46 = arith.constant 1 : index
    %c0_47 = arith.constant 0 : index
    %c0_48 = arith.constant 0 : index
    %69 = vector.load %arg1[%c1_46, %c0_47, %c0_48] : memref<9x8x512xf32, #tpu.memory_space<vmem>>, vector<1x8x512xf32>
    %70 = vector.shape_cast %69 : vector<1x8x512xf32> to vector<8x512xf32>
    %71 = arith.mulf %68, %70 : vector<8x512xf32>
    %72 = arith.truncf %71 : vector<8x512xf32> to vector<8x512xbf16>
    %c8_49 = arith.constant 8 : index
    %c0_50 = arith.constant 0 : index
    %73 = vector.load %arg7[%c8_49, %c0_50] : memref<72x512xbf16, #tpu.memory_space<vmem>>, vector<8x512xbf16>
    tpu.vector_store %arg7[%c8_49, %c0_50], %72 {strides = array<i32>} : memref<72x512xbf16, #tpu.memory_space<vmem>>, vector<8x512xbf16>,
    %c15_i32_51 = arith.constant 15 : i32
    %74 = tpu.dynamic_rotate %61 by %c15_i32_51 dim 1 : vector<8x512xf32>, i32 -> vector<8x512xf32>
    %c2_52 = arith.constant 2 : index
    %c0_53 = arith.constant 0 : index
    %c0_54 = arith.constant 0 : index
    %75 = vector.load %arg1[%c2_52, %c0_53, %c0_54] : memref<9x8x512xf32, #tpu.memory_space<vmem>>, vector<1x8x512xf32>
    %76 = vector.shape_cast %75 : vector<1x8x512xf32> to vector<8x512xf32>
    %77 = arith.mulf %74, %76 : vector<8x512xf32>
    %78 = arith.truncf %77 : vector<8x512xf32> to vector<8x512xbf16>
    %c16_55 = arith.constant 16 : index
    %c0_56 = arith.constant 0 : index
    %79 = vector.load %arg7[%c16_55, %c0_56] : memref<72x512xbf16, #tpu.memory_space<vmem>>, vector<8x512xbf16>
    tpu.vector_store %arg7[%c16_55, %c0_56], %78 {strides = array<i32>} : memref<72x512xbf16, #tpu.memory_space<vmem>>, vector<8x512xbf16>,
    %c1_i32_57 = arith.constant 1 : i32
    %80 = tpu.dynamic_rotate %61 by %c1_i32_57 dim 1 : vector<8x512xf32>, i32 -> vector<8x512xf32>
    %c3_58 = arith.constant 3 : index
    %c0_59 = arith.constant 0 : index
    %c0_60 = arith.constant 0 : index
    %81 = vector.load %arg1[%c3_58, %c0_59, %c0_60] : memref<9x8x512xf32, #tpu.memory_space<vmem>>, vector<1x8x512xf32>
    %82 = vector.shape_cast %81 : vector<1x8x512xf32> to vector<8x512xf32>
    %83 = arith.mulf %80, %82 : vector<8x512xf32>
    %84 = arith.truncf %83 : vector<8x512xf32> to vector<8x512xbf16>
    %c24_61 = arith.constant 24 : index
    %c0_62 = arith.constant 0 : index
    %85 = vector.load %arg7[%c24_61, %c0_62] : memref<72x512xbf16, #tpu.memory_space<vmem>>, vector<8x512xbf16>
    tpu.vector_store %arg7[%c24_61, %c0_62], %84 {strides = array<i32>} : memref<72x512xbf16, #tpu.memory_space<vmem>>, vector<8x512xbf16>,
    %86 = arith.truncf %61 : vector<8x512xf32> to vector<8x512xbf16>
    %c32_63 = arith.constant 32 : index
    %c0_64 = arith.constant 0 : index
    %87 = vector.load %arg7[%c32_63, %c0_64] : memref<72x512xbf16, #tpu.memory_space<vmem>>, vector<8x512xbf16>
    tpu.vector_store %arg7[%c32_63, %c0_64], %86 {strides = array<i32>} : memref<72x512xbf16, #tpu.memory_space<vmem>>, vector<8x512xbf16>,
    %c511_i32_65 = arith.constant 511 : i32
    %88 = tpu.dynamic_rotate %61 by %c511_i32_65 dim 1 : vector<8x512xf32>, i32 -> vector<8x512xf32>
    %c5_66 = arith.constant 5 : index
    %c0_67 = arith.constant 0 : index
    %c0_68 = arith.constant 0 : index
    %89 = vector.load %arg1[%c5_66, %c0_67, %c0_68] : memref<9x8x512xf32, #tpu.memory_space<vmem>>, vector<1x8x512xf32>
    %90 = vector.shape_cast %89 : vector<1x8x512xf32> to vector<8x512xf32>
    %91 = arith.mulf %88, %90 : vector<8x512xf32>
    %92 = arith.truncf %91 : vector<8x512xf32> to vector<8x512xbf16>
    %c40_69 = arith.constant 40 : index
    %c0_70 = arith.constant 0 : index
    %93 = vector.load %arg7[%c40_69, %c0_70] : memref<72x512xbf16, #tpu.memory_space<vmem>>, vector<8x512xbf16>
    tpu.vector_store %arg7[%c40_69, %c0_70], %92 {strides = array<i32>} : memref<72x512xbf16, #tpu.memory_space<vmem>>, vector<8x512xbf16>,
    %c497_i32_71 = arith.constant 497 : i32
    %94 = tpu.dynamic_rotate %61 by %c497_i32_71 dim 1 : vector<8x512xf32>, i32 -> vector<8x512xf32>
    %c6_72 = arith.constant 6 : index
    %c0_73 = arith.constant 0 : index
    %c0_74 = arith.constant 0 : index
    %95 = vector.load %arg1[%c6_72, %c0_73, %c0_74] : memref<9x8x512xf32, #tpu.memory_space<vmem>>, vector<1x8x512xf32>
    %96 = vector.shape_cast %95 : vector<1x8x512xf32> to vector<8x512xf32>
    %97 = arith.mulf %94, %96 : vector<8x512xf32>
    %98 = arith.truncf %97 : vector<8x512xf32> to vector<8x512xbf16>
    %c48_75 = arith.constant 48 : index
    %c0_76 = arith.constant 0 : index
    %99 = vector.load %arg7[%c48_75, %c0_76] : memref<72x512xbf16, #tpu.memory_space<vmem>>, vector<8x512xbf16>
    tpu.vector_store %arg7[%c48_75, %c0_76], %98 {strides = array<i32>} : memref<72x512xbf16, #tpu.memory_space<vmem>>, vector<8x512xbf16>,
    %c496_i32_77 = arith.constant 496 : i32
    %100 = tpu.dynamic_rotate %61 by %c496_i32_77 dim 1 : vector<8x512xf32>, i32 -> vector<8x512xf32>
    %c7_78 = arith.constant 7 : index
    %c0_79 = arith.constant 0 : index
    %c0_80 = arith.constant 0 : index
    %101 = vector.load %arg1[%c7_78, %c0_79, %c0_80] : memref<9x8x512xf32, #tpu.memory_space<vmem>>, vector<1x8x512xf32>
    %102 = vector.shape_cast %101 : vector<1x8x512xf32> to vector<8x512xf32>
    %103 = arith.mulf %100, %102 : vector<8x512xf32>
    %104 = arith.truncf %103 : vector<8x512xf32> to vector<8x512xbf16>
    %c56_81 = arith.constant 56 : index
    %c0_82 = arith.constant 0 : index
    %105 = vector.load %arg7[%c56_81, %c0_82] : memref<72x512xbf16, #tpu.memory_space<vmem>>, vector<8x512xbf16>
    tpu.vector_store %arg7[%c56_81, %c0_82], %104 {strides = array<i32>} : memref<72x512xbf16, #tpu.memory_space<vmem>>, vector<8x512xbf16>,
    %c495_i32_83 = arith.constant 495 : i32
    %106 = tpu.dynamic_rotate %61 by %c495_i32_83 dim 1 : vector<8x512xf32>, i32 -> vector<8x512xf32>
    %c8_84 = arith.constant 8 : index
    %c0_85 = arith.constant 0 : index
    %c0_86 = arith.constant 0 : index
    %107 = vector.load %arg1[%c8_84, %c0_85, %c0_86] : memref<9x8x512xf32, #tpu.memory_space<vmem>>, vector<1x8x512xf32>
    %108 = vector.shape_cast %107 : vector<1x8x512xf32> to vector<8x512xf32>
    %109 = arith.mulf %106, %108 : vector<8x512xf32>
    %110 = arith.truncf %109 : vector<8x512xf32> to vector<8x512xbf16>
    %c64_87 = arith.constant 64 : index
    %c0_88 = arith.constant 0 : index
    %111 = vector.load %arg7[%c64_87, %c0_88] : memref<72x512xbf16, #tpu.memory_space<vmem>>, vector<8x512xbf16>
    tpu.vector_store %arg7[%c64_87, %c0_88], %110 {strides = array<i32>} : memref<72x512xbf16, #tpu.memory_space<vmem>>, vector<8x512xbf16>,
    %c0_89 = arith.constant 0 : index
    %c0_90 = arith.constant 0 : index
    %112 = vector.load %arg4[%c0_89, %c0_90] : memref<8x72xbf16, #tpu.memory_space<vmem>>, vector<8x72xbf16>
    %c0_91 = arith.constant 0 : index
    %c0_92 = arith.constant 0 : index
    %113 = vector.load %arg7[%c0_91, %c0_92] : memref<72x512xbf16, #tpu.memory_space<vmem>>, vector<72x512xbf16>
    %cst_93 = arith.constant dense<0.000000e+00> : vector<8x512xf32>
    %114 = tpu.matmul %112, %113, %cst_93 {dimension_numbers = #tpu.dot_dimension_numbers<[1], [0], [0], [1], [0, 0, 1, 1], [], []>} : vector<8x72xbf16>, vector<72x512xbf16>, vector<8x512xf32> -> vector<8x512xf32>
    %c0_94 = arith.constant 0 : index
    %c0_95 = arith.constant 0 : index
    %115 = vector.load %arg5[%c0_94, %c0_95] : memref<8x1xf32, #tpu.memory_space<vmem>>, vector<8x1xf32>
    %116 = vector.broadcast %115 : vector<8x1xf32> to vector<8x512xf32>
    %117 = arith.addf %114, %116 : vector<8x512xf32>
    %c0_96 = arith.constant 0 : index
    %c0_97 = arith.constant 0 : index
    %118 = vector.load %arg8[%c0_96, %c0_97] : memref<8x512xf32, #tpu.memory_space<vmem>>, vector<8x512xf32>
    %119 = arith.addf %118, %117 : vector<8x512xf32>
    %c0_98 = arith.constant 0 : index
    %c0_99 = arith.constant 0 : index
    %120 = vector.load %arg6[%c0_98, %c0_99] : memref<8x512xf32, #tpu.memory_space<vmem>>, vector<8x512xf32>
    tpu.vector_store %arg6[%c0_98, %c0_99], %119 {strides = array<i32>} : memref<8x512xf32, #tpu.memory_space<vmem>>, vector<8x512xf32>,
    return
  }
}

</mosaic_0001>

<llo_original>
// kernel: resblock_pallas.1
$region0: #{resblock_pallas.1}
  #allocation0 [shape = 'u32[]', space=smem, size = 0x4, offset = 0x4, fixed_abs, tag = 'smem constant byte address 0x4 - core index']
  #allocation1 [shape = 'u32[72,128]{1,0:T(1,128)}', space=vmem, size = 0x9000, scoped, tag = 'internal scratch']
  #allocation2 [shape = 'bf16[72,512]{1,0:T(8,128)(2,1)}', space=vmem, size = 0x12000, scoped, tag = 'scratch operand']
  #allocation3 [shape = 'f32[8,512]{1,0:T(8,128)}', space=vmem, size = 0x4000, scoped, tag = 'scratch operand']
  %s0 = inlined_call_operand.vmem [shape: f32[8,512], index: 0, kind: input, shape index: {}]
  %s1 = inlined_call_operand.vmem [shape: f32[9,8,512], index: 1, kind: input, shape index: {}]
  %s2 = inlined_call_operand.vmem [shape: bf16[8,72], index: 2, kind: input, shape index: {}]
  %s3 = inlined_call_operand.vmem [shape: f32[8,1], index: 3, kind: input, shape index: {}]
  %s4 = inlined_call_operand.vmem [shape: bf16[8,72], index: 4, kind: input, shape index: {}]
  %s5 = inlined_call_operand.vmem [shape: f32[8,1], index: 5, kind: input, shape index: {}]
  %s6 = inlined_call_operand.vmem [shape: f32[8,512], index: 6, kind: output, shape index: {}]
  %s7 = sld [smem:[#allocation0]]
  $region34: #{resblock_pallas.1} parent=0
    _
  %s9 = ssub.s32 1, %s7
  %s10 = scalar_select 0, %s9, %s7
  // Predicated region
  $region2: #{resblock_pallas.1} parent=0 // pred_check
    _
  $region3: #{resblock_pallas.1} parent=0 // pred_check_branch
    %12 = sbr.rel (0) target = $region5
  $region4: #{resblock_pallas.1} parent=0 // pred_region
    _
  $region5: #{resblock_pallas.1} parent=0 // pred_fallthru
    _
  // Predicated region
  $region6: #{resblock_pallas.1} parent=0 // pred_check
    _
  $region7: #{resblock_pallas.1} parent=0 // pred_check_branch
    %14 = sbr.rel (0) target = $region9
  $region8: #{resblock_pallas.1} parent=0 // pred_region
    _
  $region9: #{resblock_pallas.1} parent=0 // pred_fallthru
    _
  // Predicated region
  $region10: #{resblock_pallas.1} parent=0 // pred_check
    _
  $region11: #{resblock_pallas.1} parent=0 // pred_check_branch
    %16 = sbr.rel (0) target = $region13
  $region12: #{resblock_pallas.1} parent=0 // pred_region
    _
  $region13: #{resblock_pallas.1} parent=0 // pred_fallthru
    _
  // Predicated region
  $region14: #{resblock_pallas.1} parent=0 // pred_check
    _
  $region15: #{resblock_pallas.1} parent=0 // pred_check_branch
    %18 = sbr.rel (0) target = $region17
  $region16: #{resblock_pallas.1} parent=0 // pred_region
    _
  $region17: #{resblock_pallas.1} parent=0 // pred_fallthru
    _
  // Predicated region
  $region18: #{resblock_pallas.1} parent=0 // pred_check
    _
  $region19: #{resblock_pallas.1} parent=0 // pred_check_branch
    %20 = sbr.rel (0) target = $region21
  $region20: #{resblock_pallas.1} parent=0 // pred_region
    _
  $region21: #{resblock_pallas.1} parent=0 // pred_fallthru
    _
  // Predicated region
  $region22: #{resblock_pallas.1} parent=0 // pred_check
    _
  $region23: #{resblock_pallas.1} parent=0 // pred_check_branch
    %22 = sbr.rel (0) target = $region25
  $region24: #{resblock_pallas.1} parent=0 // pred_region
    _
  $region25: #{resblock_pallas.1} parent=0 // pred_fallthru
    _
  %v24 = vld [vmem:[%s0] sm:$0xff]
  %v25 = vld [vmem:[%s0 + $0x8] sm:$0xff]
  %v26 = vld [vmem:[%s0 + $0x10] sm:$0xff]
  %v27 = vld [vmem:[%s0 + $0x18] sm:$0xff]
  %28 = vst [vmem:[#allocation3] sm:$0xff] %v24
  %29 = vst [vmem:[#allocation3 + $0x8] sm:$0xff] %v25
  %30 = vst [vmem:[#allocation3 + $0x10] sm:$0xff] %v26
  %31 = vst [vmem:[#allocation3 + $0x18] sm:$0xff] %v27
  %v32 = vmax.f32 %v24, 0.0
  %v33 = vmax.f32 %v25, 0.0
  %v34 = vmax.f32 %v26, 0.0
  %v35 = vmax.f32 %v27, 0.0
  %36 = vrot.lane.b32.xlu0 %v32, 17
  %v37 = vpop.permute.xlu0 %36
  %38 = vrot.lane.b32.xlu0 %v33, 17
  %v39 = vpop.permute.xlu0 %38
  %40 = vrot.lane.b32.xlu0 %v34, 17
  %v41 = vpop.permute.xlu0 %40
  %42 = vrot.lane.b32.xlu0 %v35, 17
  %v43 = vpop.permute.xlu0 %42
  %v44 = vlaneseq
  %v45 = vand.u32 %v44, 127
  %vm46 = vcmp.lt.s32.totalorder %v45, 17
  %v47 = vsel %vm46, %v41, %v43
  %v48 = vsel %vm46, %v39, %v41
  %v49 = vsel %vm46, %v37, %v39
  %v50 = vsel %vm46, %v43, %v37
  %v51 = vld [vmem:[%s1] sm:$0xff]
  %v52 = vld [vmem:[%s1 + $0x8] sm:$0xff]
  %v53 = vld [vmem:[%s1 + $0x10] sm:$0xff]
  %v54 = vld [vmem:[%s1 + $0x18] sm:$0xff]
  %v55 = vmul.f32 %v50, %v51
  %v56 = vmul.f32 %v49, %v52
  %v57 = vmul.f32 %v48, %v53
  %v58 = vmul.f32 %v47, %v54
  %v59 = vpack.c.bf16 %v56, %v55
  %v60 = vpack.c.bf16 %v58, %v57
  %61 = vst [vmem:[#allocation2] sm:$0xff] %v59
  %62 = vst [vmem:[#allocation2 + $0x8] sm:$0xff] %v60
  %63 = vrot.lane.b32.xlu0 %v32, 16
  %v64 = vpop.permute.xlu0 %63
  %65 = vrot.lane.b32.xlu0 %v33, 16
  %v66 = vpop.permute.xlu0 %65
  %67 = vrot.lane.b32.xlu0 %v34, 16
  %v68 = vpop.permute.xlu0 %67
  %69 = vrot.lane.b32.xlu0 %v35, 16
  %v70 = vpop.permute.xlu0 %69
  %vm71 = vcmp.lt.s32.totalorder %v45, 16
  %v72 = vsel %vm71, %v68, %v70
  %v73 = vsel %vm71, %v66, %v68
  %v74 = vsel %vm71, %v64, %v66
  %v75 = vsel %vm71, %v70, %v64
  %s76 = scalar_lea.vmem %s1, 32
  %v77 = vld [vmem:[%s76] sm:$0xff]
  %v78 = vld [vmem:[%s76 + $0x8] sm:$0xff]
  %v79 = vld [vmem:[%s76 + $0x10] sm:$0xff]
  %v80 = vld [vmem:[%s76 + $0x18] sm:$0xff]
  %v81 = vmul.f32 %v75, %v77
  %v82 = vmul.f32 %v74, %v78
  %v83 = vmul.f32 %v73, %v79
  %v84 = vmul.f32 %v72, %v80
  %v85 = vpack.c.bf16 %v82, %v81
  %v86 = vpack.c.bf16 %v84, %v83
  %87 = vst [vmem:[#allocation2 + $0x10] sm:$0xff] %v85
  %88 = vst [vmem:[#allocation2 + $0x18] sm:$0xff] %v86
  %89 = vrot.lane.b32.xlu0 %v32, 15
  %v90 = vpop.permute.xlu0 %89
  %91 = vrot.lane.b32.xlu0 %v33, 15
  %v92 = vpop.permute.xlu0 %91
  %93 = vrot.lane.b32.xlu0 %v34, 15
  %v94 = vpop.permute.xlu0 %93
  %95 = vrot.lane.b32.xlu0 %v35, 15
  %v96 = vpop.permute.xlu0 %95
  %vm97 = vcmp.lt.s32.totalorder %v45, 15
  %v98 = vsel %vm97, %v94, %v96
  %v99 = vsel %vm97, %v92, %v94
  %v100 = vsel %vm97, %v90, %v92
  %v101 = vsel %vm97, %v96, %v90
  %s102 = scalar_lea.vmem %s1, 64
  %v103 = vld [vmem:[%s102] sm:$0xff]
  %v104 = vld [vmem:[%s102 + $0x8] sm:$0xff]
  %v105 = vld [vmem:[%s102 + $0x10] sm:$0xff]
  %v106 = vld [vmem:[%s102 + $0x18] sm:$0xff]
  %v107 = vmul.f32 %v101, %v103
  %v108 = vmul.f32 %v100, %v104
  %v109 = vmul.f32 %v99, %v105
  %v110 = vmul.f32 %v98, %v106
  %v111 = vpack.c.bf16 %v108, %v107
  %v112 = vpack.c.bf16 %v110, %v109
  %113 = vst [vmem:[#allocation2 + $0x20] sm:$0xff] %v111
  %114 = vst [vmem:[#allocation2 + $0x28] sm:$0xff] %v112
  %115 = vrot.lane.b32.xlu0 %v32, 1
  %v116 = vpop.permute.xlu0 %115
  %117 = vrot.lane.b32.xlu0 %v33, 1
  %v118 = vpop.permute.xlu0 %117
  %119 = vrot.lane.b32.xlu0 %v34, 1
  %v120 = vpop.permute.xlu0 %119
  %121 = vrot.lane.b32.xlu0 %v35, 1
  %v122 = vpop.permute.xlu0 %121
  %vm123 = vcmp.lt.s32.totalorder %v45, 1
  %v124 = vsel %vm123, %v120, %v122
  %v125 = vsel %vm123, %v118, %v120
  %v126 = vsel %vm123, %v116, %v118
  %v127 = vsel %vm123, %v122, %v116
  %s128 = scalar_lea.vmem %s1, 96
  %v129 = vld [vmem:[%s128] sm:$0xff]
  %v130 = vld [vmem:[%s128 + $0x8] sm:$0xff]
  %v131 = vld [vmem:[%s128 + $0x10] sm:$0xff]
  %v132 = vld [vmem:[%s128 + $0x18] sm:$0xff]
  %v133 = vmul.f32 %v127, %v129
  %v134 = vmul.f32 %v126, %v130
  %v135 = vmul.f32 %v125, %v131
  %v136 = vmul.f32 %v124, %v132
  %v137 = vpack.c.bf16 %v134, %v133
  %v138 = vpack.c.bf16 %v136, %v135
  %139 = vst [vmem:[#allocation2 + $0x30] sm:$0xff] %v137
  %140 = vst [vmem:[#allocation2 + $0x38] sm:$0xff] %v138
  %v141 = vpack.c.bf16 %v33, %v32
  %v142 = vpack.c.bf16 %v35, %v34
  %143 = vst [vmem:[#allocation2 + $0x40] sm:$0xff] %v141
  %144 = vst [vmem:[#allocation2 + $0x48] sm:$0xff] %v142
  %145 = vrot.lane.b32.xlu0 %v32, 127
  %v146 = vpop.permute.xlu0 %145
  %147 = vrot.lane.b32.xlu0 %v33, 127
  %v148 = vpop.permute.xlu0 %147
  %149 = vrot.lane.b32.xlu0 %v34, 127
  %v150 = vpop.permute.xlu0 %149
  %151 = vrot.lane.b32.xlu0 %v35, 127
  %v152 = vpop.permute.xlu0 %151
  %vm153 = vcmp.lt.s32.totalorder %v45, 127
  %v154 = vsel %vm153, %v150, %v152
  %v155 = vsel %vm153, %v148, %v150
  %v156 = vsel %vm153, %v146, %v148
  %v157 = vsel %vm153, %v152, %v146
  %s158 = scalar_lea.vmem %s1, 160
  %v159 = vld [vmem:[%s158] sm:$0xff]
  %v160 = vld [vmem:[%s158 + $0x8] sm:$0xff]
  %v161 = vld [vmem:[%s158 + $0x10] sm:$0xff]
  %v162 = vld [vmem:[%s158 + $0x18] sm:$0xff]
  %v163 = vmul.f32 %v156, %v159
  %v164 = vmul.f32 %v155, %v160
  %v165 = vmul.f32 %v154, %v161
  %v166 = vmul.f32 %v157, %v162
  %v167 = vpack.c.bf16 %v164, %v163
  %v168 = vpack.c.bf16 %v166, %v165
  %169 = vst [vmem:[#allocation2 + $0x50] sm:$0xff] %v167
  %170 = vst [vmem:[#allocation2 + $0x58] sm:$0xff] %v168
  %171 = vrot.lane.b32.xlu0 %v32, 113
  %v172 = vpop.permute.xlu0 %171
  %173 = vrot.lane.b32.xlu0 %v33, 113
  %v174 = vpop.permute.xlu0 %173
  %175 = vrot.lane.b32.xlu0 %v34, 113
  %v176 = vpop.permute.xlu0 %175
  %177 = vrot.lane.b32.xlu0 %v35, 113
  %v178 = vpop.permute.xlu0 %177
  %vm179 = vcmp.lt.s32.totalorder %v45, 113
  %v180 = vsel %vm179, %v176, %v178
  %v181 = vsel %vm179, %v174, %v176
  %v182 = vsel %vm179, %v172, %v174
  %v183 = vsel %vm179, %v178, %v172
  %s184 = scalar_lea.vmem %s1, 192
  %v185 = vld [vmem:[%s184] sm:$0xff]
  %v186 = vld [vmem:[%s184 + $0x8] sm:$0xff]
  %v187 = vld [vmem:[%s184 + $0x10] sm:$0xff]
  %v188 = vld [vmem:[%s184 + $0x18] sm:$0xff]
  %v189 = vmul.f32 %v182, %v185
  %v190 = vmul.f32 %v181, %v186
  %v191 = vmul.f32 %v180, %v187
  %v192 = vmul.f32 %v183, %v188
  %v193 = vpack.c.bf16 %v190, %v189
  %v194 = vpack.c.bf16 %v192, %v191
  %195 = vst [vmem:[#allocation2 + $0x60] sm:$0xff] %v193
  %196 = vst [vmem:[#allocation2 + $0x68] sm:$0xff] %v194
  %197 = vrot.lane.b32.xlu0 %v32, 112
  %v198 = vpop.permute.xlu0 %197
  %199 = vrot.lane.b32.xlu0 %v33, 112
  %v200 = vpop.permute.xlu0 %199
  %201 = vrot.lane.b32.xlu0 %v34, 112
  %v202 = vpop.permute.xlu0 %201
  %203 = vrot.lane.b32.xlu0 %v35, 112
  %v204 = vpop.permute.xlu0 %203
  %vm205 = vcmp.lt.s32.totalorder %v45, 112
  %v206 = vsel %vm205, %v202, %v204
  %v207 = vsel %vm205, %v200, %v202
  %v208 = vsel %vm205, %v198, %v200
  %v209 = vsel %vm205, %v204, %v198
  %s210 = scalar_lea.vmem %s1, 224
  %v211 = vld [vmem:[%s210] sm:$0xff]
  %v212 = vld [vmem:[%s210 + $0x8] sm:$0xff]
  %v213 = vld [vmem:[%s210 + $0x10] sm:$0xff]
  %v214 = vld [vmem:[%s210 + $0x18] sm:$0xff]
  %v215 = vmul.f32 %v208, %v211
  %v216 = vmul.f32 %v207, %v212
  %v217 = vmul.f32 %v206, %v213
  %v218 = vmul.f32 %v209, %v214
  %v219 = vpack.c.bf16 %v216, %v215
  %v220 = vpack.c.bf16 %v218, %v217
  %221 = vst [vmem:[#allocation2 + $0x70] sm:$0xff] %v219
  %222 = vst [vmem:[#allocation2 + $0x78] sm:$0xff] %v220
  %223 = vrot.lane.b32.xlu0 %v32, 111
  %v224 = vpop.permute.xlu0 %223
  %225 = vrot.lane.b32.xlu0 %v33, 111
  %v226 = vpop.permute.xlu0 %225
  %227 = vrot.lane.b32.xlu0 %v34, 111
  %v228 = vpop.permute.xlu0 %227
  %229 = vrot.lane.b32.xlu0 %v35, 111
  %v230 = vpop.permute.xlu0 %229
  %vm231 = vcmp.lt.s32.totalorder %v45, 111
  %v232 = vsel %vm231, %v228, %v230
  %v233 = vsel %vm231, %v226, %v228
  %v234 = vsel %vm231, %v224, %v226
  %v235 = vsel %vm231, %v230, %v224
  %s236 = scalar_lea.vmem %s1, 256
  %v237 = vld [vmem:[%s236] sm:$0xff]
  %v238 = vld [vmem:[%s236 + $0x8] sm:$0xff]
  %v239 = vld [vmem:[%s236 + $0x10] sm:$0xff]
  %v240 = vld [vmem:[%s236 + $0x18] sm:$0xff]
  %v241 = vmul.f32 %v234, %v237
  %v242 = vmul.f32 %v233, %v238
  %v243 = vmul.f32 %v232, %v239
  %v244 = vmul.f32 %v235, %v240
  %v245 = vpack.c.bf16 %v242, %v241
  %v246 = vpack.c.bf16 %v244, %v243
  %247 = vst [vmem:[#allocation2 + $0x80] sm:$0xff] %v245
  %248 = vst [vmem:[#allocation2 + $0x88] sm:$0xff] %v246
  %v249 = vld [vmem:[%s2] sm:$0xf]
  %v250 = vld [vmem:[#allocation2] sm:$0xff]
  %v251 = vld [vmem:[#allocation2 + $0x8] sm:$0xff]
  %v252 = vld [vmem:[#allocation2 + $0x10] sm:$0xff]
  %v253 = vld [vmem:[#allocation2 + $0x18] sm:$0xff]
  %v254 = vld [vmem:[#allocation2 + $0x20] sm:$0xff]
  %v255 = vld [vmem:[#allocation2 + $0x28] sm:$0xff]
  %v256 = vld [vmem:[#allocation2 + $0x30] sm:$0xff]
  %v257 = vld [vmem:[#allocation2 + $0x38] sm:$0xff]
  %v258 = vld [vmem:[#allocation2 + $0x40] sm:$0xff]
  %v259 = vld [vmem:[#allocation2 + $0x48] sm:$0xff]
  %v260 = vld [vmem:[#allocation2 + $0x50] sm:$0xff]
  %v261 = vld [vmem:[#allocation2 + $0x58] sm:$0xff]
  %v262 = vld [vmem:[#allocation2 + $0x60] sm:$0xff]
  %v263 = vld [vmem:[#allocation2 + $0x68] sm:$0xff]
  %v264 = vld [vmem:[#allocation2 + $0x70] sm:$0xff]
  %v265 = vld [vmem:[#allocation2 + $0x78] sm:$0xff]
  %v266 = vld [vmem:[#allocation2 + $0x80] sm:$0xff]
  %v267 = vld [vmem:[#allocation2 + $0x88] sm:$0xff]
  %v268 = vld [vmem:[%s3] sm:$0xff]
  %270 = vset.pattern.permute.xlu0 0
  %271 = vperm.xlu0 %270, %v268
  %v272 = vpop.permute.xlu0 %271
  %v292 = vunpack.c.l.b16 %v250
  %v293 = vunpack.c.h.b16 %v250
  %v294 = vunpack.c.l.b16 %v251
  %v295 = vunpack.c.h.b16 %v251
  %v296 = vunpack.c.l.b16 %v252
  %v297 = vunpack.c.h.b16 %v252
  %v298 = vunpack.c.l.b16 %v253
  %v299 = vunpack.c.h.b16 %v253
  %v300 = vunpack.c.l.b16 %v254
  %v301 = vunpack.c.h.b16 %v254
  %v302 = vunpack.c.l.b16 %v255
  %v303 = vunpack.c.h.b16 %v255
  %v304 = vunpack.c.l.b16 %v256
  %v305 = vunpack.c.h.b16 %v256
  %v306 = vunpack.c.l.b16 %v257
  %v307 = vunpack.c.h.b16 %v257
  %v308 = vunpack.c.l.b16 %v258
  %v309 = vunpack.c.h.b16 %v258
  %v310 = vunpack.c.l.b16 %v259
  %v311 = vunpack.c.h.b16 %v259
  %v312 = vunpack.c.l.b16 %v260
  %v313 = vunpack.c.h.b16 %v260
  %v314 = vunpack.c.l.b16 %v261
  %v315 = vunpack.c.h.b16 %v261
  %v316 = vunpack.c.l.b16 %v262
  %v317 = vunpack.c.h.b16 %v262
  %v318 = vunpack.c.l.b16 %v263
  %v319 = vunpack.c.h.b16 %v263
  %v320 = vunpack.c.l.b16 %v264
  %v321 = vunpack.c.h.b16 %v264
  %v322 = vunpack.c.l.b16 %v265
  %v323 = vunpack.c.h.b16 %v265
  %v324 = vunpack.c.l.b16 %v266
  %v325 = vunpack.c.h.b16 %v266
  %v326 = vunpack.c.l.b16 %v267
  %v327 = vunpack.c.h.b16 %v267
  %v328 = vpack.c.b16 %v296, %v292
  %v329 = vpack.c.b16 %v297, %v293
  %v330 = vpack.c.b16 %v298, %v294
  %v331 = vpack.c.b16 %v299, %v295
  %v332 = vpack.c.b16 %v304, %v300
  %v333 = vpack.c.b16 %v305, %v301
  %v334 = vpack.c.b16 %v306, %v302
  %v335 = vpack.c.b16 %v307, %v303
  %v336 = vpack.c.b16 %v312, %v308
  %v337 = vpack.c.b16 %v313, %v309
  %v338 = vpack.c.b16 %v314, %v310
  %v339 = vpack.c.b16 %v315, %v311
  %v340 = vpack.c.b16 %v320, %v316
  %v341 = vpack.c.b16 %v321, %v317
  %v342 = vpack.c.b16 %v322, %v318
  %v343 = vpack.c.b16 %v323, %v319
  %v344 = vpack.c.b16 %v324, %v324
  %v345 = vpack.c.b16 %v325, %v325
  %v346 = vpack.c.b16 %v326, %v326
  %v347 = vpack.c.b16 %v327, %v327
  %vm364 = vcmask 588800
  %v366 = vsel %vm364, %v249, 0
  %vm368 = vcmask 1043456
  %v370 = vsel %vm368, %v344, 0
  %v373 = vsel %vm368, %v345, 0
  %v376 = vsel %vm368, %v346, 0
  %v379 = vsel %vm368, %v347, 0
  %381 = vmatpush.bf16.msra.mxu0 0
  %382 = vmatpush.bf16.msra.mxu0 0
  %383 = vmatpush.bf16.msra.mxu0 0
  %384 = vmatpush.bf16.msra.mxu0 %v370
  %385 = vmatpush.bf16.msra.mxu0 %v340
  %386 = vmatpush.bf16.msra.mxu0 %v336
  %387 = vmatpush.bf16.msra.mxu0 %v332
  %388 = vmatpush.bf16.msra.mxu0 %v328
  %389 = vmatmul.bf16.gmra.mxu0 %v366
  %v390 = vpop.f32.mrf.mxu0
  %v391 = vadd.f32 %v272, %v390
  %v392 = vpop.f32.mrf.mxu0
  %393 = vdwg.mxu0
  %394 = vmatpush.bf16.msra.mxu0 0
  %395 = vmatpush.bf16.msra.mxu0 0
  %396 = vmatpush.bf16.msra.mxu0 0
  %397 = vmatpush.bf16.msra.mxu0 %v373
  %398 = vmatpush.bf16.msra.mxu0 %v341
  %399 = vmatpush.bf16.msra.mxu0 %v337
  %400 = vmatpush.bf16.msra.mxu0 %v333
  %401 = vmatpush.bf16.msra.mxu0 %v329
  %402 = vmatmul.bf16.gmra.mxu0 %v366
  %v403 = vpop.f32.mrf.mxu0
  %v404 = vadd.f32 %v272, %v403
  %v405 = vpop.f32.mrf.mxu0
  %406 = vdwg.mxu0
  %407 = vmatpush.bf16.msra.mxu0 0
  %408 = vmatpush.bf16.msra.mxu0 0
  %409 = vmatpush.bf16.msra.mxu0 0
  %410 = vmatpush.bf16.msra.mxu0 %v376
  %411 = vmatpush.bf16.msra.mxu0 %v342
  %412 = vmatpush.bf16.msra.mxu0 %v338
  %413 = vmatpush.bf16.msra.mxu0 %v334
  %414 = vmatpush.bf16.msra.mxu0 %v330
  %415 = vmatmul.bf16.gmra.mxu0 %v366
  %v416 = vpop.f32.mrf.mxu0
  %v417 = vadd.f32 %v272, %v416
  %v418 = vpop.f32.mrf.mxu0
  %419 = vdwg.mxu0
  %420 = vmatpush.bf16.msra.mxu0 0
  %421 = vmatpush.bf16.msra.mxu0 0
  %422 = vmatpush.bf16.msra.mxu0 0
  %423 = vmatpush.bf16.msra.mxu0 %v379
  %424 = vmatpush.bf16.msra.mxu0 %v343
  %425 = vmatpush.bf16.msra.mxu0 %v339
  %426 = vmatpush.bf16.msra.mxu0 %v335
  %427 = vmatpush.bf16.msra.mxu0 %v331
  %428 = vmatmul.bf16.gmra.mxu0 %v366
  %v429 = vpop.f32.mrf.mxu0
  %v430 = vadd.f32 %v272, %v429
  %v431 = vpop.f32.mrf.mxu0
  %432 = vdwg.mxu0
  %v433 = vmax.f32 %v391, 0.0
  %v434 = vmax.f32 %v404, 0.0
  %v435 = vmax.f32 %v417, 0.0
  %v436 = vmax.f32 %v430, 0.0
  %437 = vrot.lane.b32.xlu0 %v433, 17
  %v438 = vpop.permute.xlu0 %437
  %439 = vrot.lane.b32.xlu0 %v434, 17
  %v440 = vpop.permute.xlu0 %439
  %441 = vrot.lane.b32.xlu0 %v435, 17
  %v442 = vpop.permute.xlu0 %441
  %443 = vrot.lane.b32.xlu0 %v436, 17
  %v444 = vpop.permute.xlu0 %443
  %v445 = vsel %vm46, %v442, %v444
  %v446 = vsel %vm46, %v440, %v442
  %v447 = vsel %vm46, %v438, %v440
  %v448 = vsel %vm46, %v444, %v438
  %v449 = vld [vmem:[%s1] sm:$0xff]
  %v450 = vld [vmem:[%s1 + $0x8] sm:$0xff]
  %v451 = vld [vmem:[%s1 + $0x10] sm:$0xff]
  %v452 = vld [vmem:[%s1 + $0x18] sm:$0xff]
  %v453 = vmul.f32 %v448, %v449
  %v454 = vmul.f32 %v447, %v450
  %v455 = vmul.f32 %v446, %v451
  %v456 = vmul.f32 %v445, %v452
  %v457 = vpack.c.bf16 %v454, %v453
  %v458 = vpack.c.bf16 %v456, %v455
  %459 = vst [vmem:[#allocation2] sm:$0xff] %v457
  %460 = vst [vmem:[#allocation2 + $0x8] sm:$0xff] %v458
  %461 = vrot.lane.b32.xlu0 %v433, 16
  %v462 = vpop.permute.xlu0 %461
  %463 = vrot.lane.b32.xlu0 %v434, 16
  %v464 = vpop.permute.xlu0 %463
  %465 = vrot.lane.b32.xlu0 %v435, 16
  %v466 = vpop.permute.xlu0 %465
  %467 = vrot.lane.b32.xlu0 %v436, 16
  %v468 = vpop.permute.xlu0 %467
  %v469 = vsel %vm71, %v466, %v468
  %v470 = vsel %vm71, %v464, %v466
  %v471 = vsel %vm71, %v462, %v464
  %v472 = vsel %vm71, %v468, %v462
  %v473 = vld [vmem:[%s76] sm:$0xff]
  %v474 = vld [vmem:[%s76 + $0x8] sm:$0xff]
  %v475 = vld [vmem:[%s76 + $0x10] sm:$0xff]
  %v476 = vld [vmem:[%s76 + $0x18] sm:$0xff]
  %v477 = vmul.f32 %v472, %v473
  %v478 = vmul.f32 %v471, %v474
  %v479 = vmul.f32 %v470, %v475
  %v480 = vmul.f32 %v469, %v476
  %v481 = vpack.c.bf16 %v478, %v477
  %v482 = vpack.c.bf16 %v480, %v479
  %483 = vst [vmem:[#allocation2 + $0x10] sm:$0xff] %v481
  %484 = vst [vmem:[#allocation2 + $0x18] sm:$0xff] %v482
  %485 = vrot.lane.b32.xlu0 %v433, 15
  %v486 = vpop.permute.xlu0 %485
  %487 = vrot.lane.b32.xlu0 %v434, 15
  %v488 = vpop.permute.xlu0 %487
  %489 = vrot.lane.b32.xlu0 %v435, 15
  %v490 = vpop.permute.xlu0 %489
  %491 = vrot.lane.b32.xlu0 %v436, 15
  %v492 = vpop.permute.xlu0 %491
  %v493 = vsel %vm97, %v490, %v492
  %v494 = vsel %vm97, %v488, %v490
  %v495 = vsel %vm97, %v486, %v488
  %v496 = vsel %vm97, %v492, %v486
  %v497 = vld [vmem:[%s102] sm:$0xff]
  %v498 = vld [vmem:[%s102 + $0x8] sm:$0xff]
  %v499 = vld [vmem:[%s102 + $0x10] sm:$0xff]
  %v500 = vld [vmem:[%s102 + $0x18] sm:$0xff]
  %v501 = vmul.f32 %v496, %v497
  %v502 = vmul.f32 %v495, %v498
  %v503 = vmul.f32 %v494, %v499
  %v504 = vmul.f32 %v493, %v500
  %v505 = vpack.c.bf16 %v502, %v501
  %v506 = vpack.c.bf16 %v504, %v503
  %507 = vst [vmem:[#allocation2 + $0x20] sm:$0xff] %v505
  %508 = vst [vmem:[#allocation2 + $0x28] sm:$0xff] %v506
  %509 = vrot.lane.b32.xlu0 %v433, 1
  %v510 = vpop.permute.xlu0 %509
  %511 = vrot.lane.b32.xlu0 %v434, 1
  %v512 = vpop.permute.xlu0 %511
  %513 = vrot.lane.b32.xlu0 %v435, 1
  %v514 = vpop.permute.xlu0 %513
  %515 = vrot.lane.b32.xlu0 %v436, 1
  %v516 = vpop.permute.xlu0 %515
  %v517 = vsel %vm123, %v514, %v516
  %v518 = vsel %vm123, %v512, %v514
  %v519 = vsel %vm123, %v510, %v512
  %v520 = vsel %vm123, %v516, %v510
  %v521 = vld [vmem:[%s128] sm:$0xff]
  %v522 = vld [vmem:[%s128 + $0x8] sm:$0xff]
  %v523 = vld [vmem:[%s128 + $0x10] sm:$0xff]
  %v524 = vld [vmem:[%s128 + $0x18] sm:$0xff]
  %v525 = vmul.f32 %v520, %v521
  %v526 = vmul.f32 %v519, %v522
  %v527 = vmul.f32 %v518, %v523
  %v528 = vmul.f32 %v517, %v524
  %v529 = vpack.c.bf16 %v526, %v525
  %v530 = vpack.c.bf16 %v528, %v527
  %531 = vst [vmem:[#allocation2 + $0x30] sm:$0xff] %v529
  %532 = vst [vmem:[#allocation2 + $0x38] sm:$0xff] %v530
  %v533 = vpack.c.bf16 %v434, %v433
  %v534 = vpack.c.bf16 %v436, %v435
  %535 = vst [vmem:[#allocation2 + $0x40] sm:$0xff] %v533
  %536 = vst [vmem:[#allocation2 + $0x48] sm:$0xff] %v534
  %537 = vrot.lane.b32.xlu0 %v433, 127
  %v538 = vpop.permute.xlu0 %537
  %539 = vrot.lane.b32.xlu0 %v434, 127
  %v540 = vpop.permute.xlu0 %539
  %541 = vrot.lane.b32.xlu0 %v435, 127
  %v542 = vpop.permute.xlu0 %541
  %543 = vrot.lane.b32.xlu0 %v436, 127
  %v544 = vpop.permute.xlu0 %543
  %v545 = vsel %vm153, %v542, %v544
  %v546 = vsel %vm153, %v540, %v542
  %v547 = vsel %vm153, %v538, %v540
  %v548 = vsel %vm153, %v544, %v538
  %v549 = vld [vmem:[%s158] sm:$0xff]
  %v550 = vld [vmem:[%s158 + $0x8] sm:$0xff]
  %v551 = vld [vmem:[%s158 + $0x10] sm:$0xff]
  %v552 = vld [vmem:[%s158 + $0x18] sm:$0xff]
  %v553 = vmul.f32 %v547, %v549
  %v554 = vmul.f32 %v546, %v550
  %v555 = vmul.f32 %v545, %v551
  %v556 = vmul.f32 %v548, %v552
  %v557 = vpack.c.bf16 %v554, %v553
  %v558 = vpack.c.bf16 %v556, %v555
  %559 = vst [vmem:[#allocation2 + $0x50] sm:$0xff] %v557
  %560 = vst [vmem:[#allocation2 + $0x58] sm:$0xff] %v558
  %561 = vrot.lane.b32.xlu0 %v433, 113
  %v562 = vpop.permute.xlu0 %561
  %563 = vrot.lane.b32.xlu0 %v434, 113
  %v564 = vpop.permute.xlu0 %563
  %565 = vrot.lane.b32.xlu0 %v435, 113
  %v566 = vpop.permute.xlu0 %565
  %567 = vrot.lane.b32.xlu0 %v436, 113
  %v568 = vpop.permute.xlu0 %567
  %v569 = vsel %vm179, %v566, %v568
  %v570 = vsel %vm179, %v564, %v566
  %v571 = vsel %vm179, %v562, %v564
  %v572 = vsel %vm179, %v568, %v562
  %v573 = vld [vmem:[%s184] sm:$0xff]
  %v574 = vld [vmem:[%s184 + $0x8] sm:$0xff]
  %v575 = vld [vmem:[%s184 + $0x10] sm:$0xff]
  %v576 = vld [vmem:[%s184 + $0x18] sm:$0xff]
  %v577 = vmul.f32 %v571, %v573
  %v578 = vmul.f32 %v570, %v574
  %v579 = vmul.f32 %v569, %v575
  %v580 = vmul.f32 %v572, %v576
  %v581 = vpack.c.bf16 %v578, %v577
  %v582 = vpack.c.bf16 %v580, %v579
  %583 = vst [vmem:[#allocation2 + $0x60] sm:$0xff] %v581
  %584 = vst [vmem:[#allocation2 + $0x68] sm:$0xff] %v582
  %585 = vrot.lane.b32.xlu0 %v433, 112
  %v586 = vpop.permute.xlu0 %585
  %587 = vrot.lane.b32.xlu0 %v434, 112
  %v588 = vpop.permute.xlu0 %587
  %589 = vrot.lane.b32.xlu0 %v435, 112
  %v590 = vpop.permute.xlu0 %589
  %591 = vrot.lane.b32.xlu0 %v436, 112
  %v592 = vpop.permute.xlu0 %591
  %v593 = vsel %vm205, %v590, %v592
  %v594 = vsel %vm205, %v588, %v590
  %v595 = vsel %vm205, %v586, %v588
  %v596 = vsel %vm205, %v592, %v586
  %v597 = vld [vmem:[%s210] sm:$0xff]
  %v598 = vld [vmem:[%s210 + $0x8] sm:$0xff]
  %v599 = vld [vmem:[%s210 + $0x10] sm:$0xff]
  %v600 = vld [vmem:[%s210 + $0x18] sm:$0xff]
  %v601 = vmul.f32 %v595, %v597
  %v602 = vmul.f32 %v594, %v598
  %v603 = vmul.f32 %v593, %v599
  %v604 = vmul.f32 %v596, %v600
  %v605 = vpack.c.bf16 %v602, %v601
  %v606 = vpack.c.bf16 %v604, %v603
  %607 = vst [vmem:[#allocation2 + $0x70] sm:$0xff] %v605
  %608 = vst [vmem:[#allocation2 + $0x78] sm:$0xff] %v606
  %609 = vrot.lane.b32.xlu0 %v433, 111
  %v610 = vpop.permute.xlu0 %609
  %611 = vrot.lane.b32.xlu0 %v434, 111
  %v612 = vpop.permute.xlu0 %611
  %613 = vrot.lane.b32.xlu0 %v435, 111
  %v614 = vpop.permute.xlu0 %613
  %615 = vrot.lane.b32.xlu0 %v436, 111
  %v616 = vpop.permute.xlu0 %615
  %v617 = vsel %vm231, %v614, %v616
  %v618 = vsel %vm231, %v612, %v614
  %v619 = vsel %vm231, %v610, %v612
  %v620 = vsel %vm231, %v616, %v610
  %v621 = vld [vmem:[%s236] sm:$0xff]
  %v622 = vld [vmem:[%s236 + $0x8] sm:$0xff]
  %v623 = vld [vmem:[%s236 + $0x10] sm:$0xff]
  %v624 = vld [vmem:[%s236 + $0x18] sm:$0xff]
  %v625 = vmul.f32 %v619, %v621
  %v626 = vmul.f32 %v618, %v622
  %v627 = vmul.f32 %v617, %v623
  %v628 = vmul.f32 %v620, %v624
  %v629 = vpack.c.bf16 %v626, %v625
  %v630 = vpack.c.bf16 %v628, %v627
  %631 = vst [vmem:[#allocation2 + $0x80] sm:$0xff] %v629
  %632 = vst [vmem:[#allocation2 + $0x88] sm:$0xff] %v630
  %v633 = vld [vmem:[%s4] sm:$0xf]
  %v634 = vld [vmem:[#allocation2] sm:$0xff]
  %v635 = vld [vmem:[#allocation2 + $0x8] sm:$0xff]
  %v636 = vld [vmem:[#allocation2 + $0x10] sm:$0xff]
  %v637 = vld [vmem:[#allocation2 + $0x18] sm:$0xff]
  %v638 = vld [vmem:[#allocation2 + $0x20] sm:$0xff]
  %v639 = vld [vmem:[#allocation2 + $0x28] sm:$0xff]
  %v640 = vld [vmem:[#allocation2 + $0x30] sm:$0xff]
  %v641 = vld [vmem:[#allocation2 + $0x38] sm:$0xff]
  %v642 = vld [vmem:[#allocation2 + $0x40] sm:$0xff]
  %v643 = vld [vmem:[#allocation2 + $0x48] sm:$0xff]
  %v644 = vld [vmem:[#allocation2 + $0x50] sm:$0xff]
  %v645 = vld [vmem:[#allocation2 + $0x58] sm:$0xff]
  %v646 = vld [vmem:[#allocation2 + $0x60] sm:$0xff]
  %v647 = vld [vmem:[#allocation2 + $0x68] sm:$0xff]
  %v648 = vld [vmem:[#allocation2 + $0x70] sm:$0xff]
  %v649 = vld [vmem:[#allocation2 + $0x78] sm:$0xff]
  %v650 = vld [vmem:[#allocation2 + $0x80] sm:$0xff]
  %v651 = vld [vmem:[#allocation2 + $0x88] sm:$0xff]
  %v652 = vld [vmem:[%s5] sm:$0xff]
  %654 = vset.pattern.permute.xlu0 0
  %655 = vperm.xlu0 %654, %v652
  %v656 = vpop.permute.xlu0 %655
  %v676 = vunpack.c.l.b16 %v634
  %v677 = vunpack.c.h.b16 %v634
  %v678 = vunpack.c.l.b16 %v635
  %v679 = vunpack.c.h.b16 %v635
  %v680 = vunpack.c.l.b16 %v636
  %v681 = vunpack.c.h.b16 %v636
  %v682 = vunpack.c.l.b16 %v637
  %v683 = vunpack.c.h.b16 %v637
  %v684 = vunpack.c.l.b16 %v638
  %v685 = vunpack.c.h.b16 %v638
  %v686 = vunpack.c.l.b16 %v639
  %v687 = vunpack.c.h.b16 %v639
  %v688 = vunpack.c.l.b16 %v640
  %v689 = vunpack.c.h.b16 %v640
  %v690 = vunpack.c.l.b16 %v641
  %v691 = vunpack.c.h.b16 %v641
  %v692 = vunpack.c.l.b16 %v642
  %v693 = vunpack.c.h.b16 %v642
  %v694 = vunpack.c.l.b16 %v643
  %v695 = vunpack.c.h.b16 %v643
  %v696 = vunpack.c.l.b16 %v644
  %v697 = vunpack.c.h.b16 %v644
  %v698 = vunpack.c.l.b16 %v645
  %v699 = vunpack.c.h.b16 %v645
  %v700 = vunpack.c.l.b16 %v646
  %v701 = vunpack.c.h.b16 %v646
  %v702 = vunpack.c.l.b16 %v647
  %v703 = vunpack.c.h.b16 %v647
  %v704 = vunpack.c.l.b16 %v648
  %v705 = vunpack.c.h.b16 %v648
  %v706 = vunpack.c.l.b16 %v649
  %v707 = vunpack.c.h.b16 %v649
  %v708 = vunpack.c.l.b16 %v650
  %v709 = vunpack.c.h.b16 %v650
  %v710 = vunpack.c.l.b16 %v651
  %v711 = vunpack.c.h.b16 %v651
  %v712 = vpack.c.b16 %v680, %v676
  %v713 = vpack.c.b16 %v681, %v677
  %v714 = vpack.c.b16 %v682, %v678
  %v715 = vpack.c.b16 %v683, %v679
  %v716 = vpack.c.b16 %v688, %v684
  %v717 = vpack.c.b16 %v689, %v685
  %v718 = vpack.c.b16 %v690, %v686
  %v719 = vpack.c.b16 %v691, %v687
  %v720 = vpack.c.b16 %v696, %v692
  %v721 = vpack.c.b16 %v697, %v693
  %v722 = vpack.c.b16 %v698, %v694
  %v723 = vpack.c.b16 %v699, %v695
  %v724 = vpack.c.b16 %v704, %v700
  %v725 = vpack.c.b16 %v705, %v701
  %v726 = vpack.c.b16 %v706, %v702
  %v727 = vpack.c.b16 %v707, %v703
  %v728 = vpack.c.b16 %v708, %v708
  %v729 = vpack.c.b16 %v709, %v709
  %v730 = vpack.c.b16 %v710, %v710
  %v731 = vpack.c.b16 %v711, %v711
  %v749 = vsel %vm364, %v633, 0
  %v752 = vsel %vm368, %v728, 0
  %v755 = vsel %vm368, %v729, 0
  %v758 = vsel %vm368, %v730, 0
  %v761 = vsel %vm368, %v731, 0
  %763 = vmatpush.bf16.msra.mxu0 0
  %764 = vmatpush.bf16.msra.mxu0 0
  %765 = vmatpush.bf16.msra.mxu0 0
  %766 = vmatpush.bf16.msra.mxu0 %v752
  %767 = vmatpush.bf16.msra.mxu0 %v724
  %768 = vmatpush.bf16.msra.mxu0 %v720
  %769 = vmatpush.bf16.msra.mxu0 %v716
  %770 = vmatpush.bf16.msra.mxu0 %v712
  %771 = vmatmul.bf16.gmra.mxu0 %v749
  %v772 = vpop.f32.mrf.mxu0
  %v773 = vadd.f32 %v656, %v772
  %v774 = vpop.f32.mrf.mxu0
  %775 = vdwg.mxu0
  %776 = vmatpush.bf16.msra.mxu0 0
  %777 = vmatpush.bf16.msra.mxu0 0
  %778 = vmatpush.bf16.msra.mxu0 0
  %779 = vmatpush.bf16.msra.mxu0 %v755
  %780 = vmatpush.bf16.msra.mxu0 %v725
  %781 = vmatpush.bf16.msra.mxu0 %v721
  %782 = vmatpush.bf16.msra.mxu0 %v717
  %783 = vmatpush.bf16.msra.mxu0 %v713
  %784 = vmatmul.bf16.gmra.mxu0 %v749
  %v785 = vpop.f32.mrf.mxu0
  %v786 = vadd.f32 %v656, %v785
  %v787 = vpop.f32.mrf.mxu0
  %788 = vdwg.mxu0
  %789 = vmatpush.bf16.msra.mxu0 0
  %790 = vmatpush.bf16.msra.mxu0 0
  %791 = vmatpush.bf16.msra.mxu0 0
  %792 = vmatpush.bf16.msra.mxu0 %v758
  %793 = vmatpush.bf16.msra.mxu0 %v726
  %794 = vmatpush.bf16.msra.mxu0 %v722
  %795 = vmatpush.bf16.msra.mxu0 %v718
  %796 = vmatpush.bf16.msra.mxu0 %v714
  %797 = vmatmul.bf16.gmra.mxu0 %v749
  %v798 = vpop.f32.mrf.mxu0
  %v799 = vadd.f32 %v656, %v798
  %v800 = vpop.f32.mrf.mxu0
  %801 = vdwg.mxu0
  %802 = vmatpush.bf16.msra.mxu0 0
  %803 = vmatpush.bf16.msra.mxu0 0
  %804 = vmatpush.bf16.msra.mxu0 0
  %805 = vmatpush.bf16.msra.mxu0 %v761
  %806 = vmatpush.bf16.msra.mxu0 %v727
  %807 = vmatpush.bf16.msra.mxu0 %v723
  %808 = vmatpush.bf16.msra.mxu0 %v719
  %809 = vmatpush.bf16.msra.mxu0 %v715
  %810 = vmatmul.bf16.gmra.mxu0 %v749
  %v811 = vpop.f32.mrf.mxu0
  %v812 = vadd.f32 %v656, %v811
  %v813 = vpop.f32.mrf.mxu0
  %814 = vdwg.mxu0
  %v815 = vld [vmem:[#allocation3] sm:$0xff]
  %v816 = vld [vmem:[#allocation3 + $0x8] sm:$0xff]
  %v817 = vld [vmem:[#allocation3 + $0x10] sm:$0xff]
  %v818 = vld [vmem:[#allocation3 + $0x18] sm:$0xff]
  %v819 = vadd.f32 %v815, %v773
  %v820 = vadd.f32 %v816, %v786
  %v821 = vadd.f32 %v817, %v799
  %v822 = vadd.f32 %v818, %v812
  %823 = vst [vmem:[%s6] sm:$0xff] %v819
  %824 = vst [vmem:[%s6 + $0x8] sm:$0xff] %v820
  %825 = vst [vmem:[%s6 + $0x10] sm:$0xff] %v821
  %826 = vst [vmem:[%s6 + $0x18] sm:$0xff] %v822
  // Predicated region
  $region26: #{resblock_pallas.1} parent=0 // pred_check
    _
  $region27: #{resblock_pallas.1} parent=0 // pred_check_branch
    %828 = sbr.rel (0) target = $region29
  $region28: #{resblock_pallas.1} parent=0 // pred_region
    _
  $region29: #{resblock_pallas.1} parent=0 // pred_fallthru
    _
  // Predicated region
  $region30: #{resblock_pallas.1} parent=0 // pred_check
    _
  $region31: #{resblock_pallas.1} parent=0 // pred_check_branch
    %830 = sbr.rel (0) target = $region33
  $region32: #{resblock_pallas.1} parent=0 // pred_region
    _
  $region33: #{resblock_pallas.1} parent=0 // pred_fallthru
    _

</llo_original>
